<compile_context>
chip_gen: v7x
topology: tpu7x:2x2x1
jax: 0.10.0
libtpu: 0.0.40
codegen_flags: <defaults>
</compile_context>

<pallas_src>
import numpy as np
import jax
import jax.numpy as jnp
from jax import lax
from jax.experimental import pallas as pl
from jax.experimental.pallas import tpu as pltpu


def _round_up(x, m):
    return ((x + m - 1) // m) * m


def _vmem_capacity_bytes():
    """Best-effort query of per-core VMEM capacity; conservative default."""
    try:
        info = pltpu.get_tpu_info()
        for name in ("vmem_capacity_bytes", "vmem_bytes", "vmem_size_bytes"):
            cap = getattr(info, name, None)
            if cap:
                return int(cap)
    except Exception:
        pass
    return 64 * 1024 * 1024  # v7x-sized conservative default


def _working_set_bytes(hw, K, tf, w_bufs):
    w = hw * K * 2 * w_bufs      # bf16 weight block(s)
    f = K * tf * 2 * 2           # bf16 frame tile, double-buffered
    o = hw * tf * 4 * 2          # f32 output tile, double-buffered
    return w + f + o


def _stft_kernel(w_ref, f_ref, o_ref):
    # Single full-K MXU matmul per grid step.  The weight block is
    # VMEM-resident (constant block index + Buffered(1)), so the only
    # per-step HBM traffic is the frame tile in and the output tile out.
    o_ref[...] = jnp.dot(w_ref[...], f_ref[...],
                         preferred_element_type=jnp.float32)


def _frames_transposed(xp_bf16, n_fft, n_hop, n_frames):
    """frames_t[b, n, t] = xp[b, t*n_hop + n]  ->  (batch, n_fft, n_frames)."""
    batch = xp_bf16.shape[0]
    if n_fft % n_hop == 0:
        # Build from r non-overlapping strided reshapes: no XLA gather, bf16
        # intermediate only.
        r = n_fft // n_hop
        slabs = []
        for q in range(r):
            z = xp_bf16[:, q * n_hop: q * n_hop + n_frames * n_hop]
            z = z.reshape(batch, n_frames, n_hop)
            slabs.append(jnp.transpose(z, (0, 2, 1)))   # (batch, n_hop, n_frames)
        return jnp.concatenate(slabs, axis=1)            # (batch, n_fft, n_frames)
    # TODO(synk): move framing into the kernel (signal via memory_space=pl.ANY
    # + per-tile strided DMAs) to avoid the n_fft/n_hop-x frame blow-up for
    # hop sizes that do not divide n_fft.
    idx = jnp.arange(n_fft)[:, None] + jnp.arange(n_frames)[None, :] * n_hop
    return xp_bf16[:, idx]


def my_stft(x, n_fft=4096, n_hop=1024):
    x = jnp.asarray(x, jnp.float32)
    batch, _ = x.shape
    n_freq = n_fft // 2 + 1
    K = n_fft
    Nr = _round_up(n_freq, 8)                 # sublane-align each (re / im) half

    # ---- framing glue (torch.stft: center=True, reflect pad) ----
    pad = n_fft // 2
    xp = jnp.pad(x, ((0, 0), (pad, pad)), mode="reflect")
    n_frames = 1 + (xp.shape[1] - n_fft) // n_hop

    frames_t = _frames_transposed(xp.astype(jnp.bfloat16), n_fft, n_hop, n_frames)
    Tp = _round_up(n_frames, 128)             # lane-dense frame axis
    frames_t = jnp.pad(frames_t, ((0, 0), (0, 0), (0, Tp - n_frames)))

    # ---- fused windowed-DFT weight matrix [real ; imag] ----
    n = np.arange(n_fft)
    window = 0.5 * (1.0 - np.cos(2.0 * np.pi * n / n_fft))   # hann_window(periodic=True)
    f = np.arange(n_freq)
    ang = 2.0 * np.pi * np.outer(f, n) / n_fft               # (n_freq, n_fft)
    w_t = np.zeros((2 * Nr, K), np.float32)
    w_t[:n_freq] = window[None, :] * np.cos(ang)
    w_t[Nr:Nr + n_freq] = -window[None, :] * np.sin(ang)
    w_t = jnp.asarray(w_t).astype(jnp.bfloat16)

    # ---- generation-aware tiling ----
    cap = _vmem_capacity_bytes()
    # Big-VMEM parts (v5e/v6e: 128 MiB) keep the whole weight resident; small
    # parts (v7x: 64 MiB) split the weight into real / imag halves along a
    # leading frequency grid axis (also guarantees >= 2 parallel work items
    # for the two v7x TensorCores).
    n_halves = 1 if cap >= 100 * 1024 * 1024 else 2
    hw = (2 * Nr) // n_halves
    if _working_set_bytes(hw, K, 128, 1) > cap - 16 * 1024 * 1024 and n_halves == 1:
        n_halves, hw = 2, Nr                  # safety: force split if too big

    # Largest lane-dense frame tile that divides Tp and fits VMEM.
    tf = 128
    for cand in (512, 256, 128):
        if Tp % cand == 0 and _working_set_bytes(hw, K, cand, 1) <= cap - 16 * 1024 * 1024:
            tf = cand
            break

    def build(weight_buffers):
        vmem_limit = _working_set_bytes(hw, K, tf, weight_buffers) + 12 * 1024 * 1024
        vmem_limit = max(32 * 1024 * 1024, min(vmem_limit, cap - 8 * 1024 * 1024))
        w_kwargs = {"pipeline_mode": pl.Buffered(1)} if weight_buffers == 1 else {}
        return pl.pallas_call(
            _stft_kernel,
            out_shape=jax.ShapeDtypeStruct((batch, 2 * Nr, Tp), jnp.float32),
            grid_spec=pltpu.PrefetchScalarGridSpec(
                num_scalar_prefetch=0,
                # h outermost -> each weight half fetched once total and kept
                # resident across all batches / frame tiles.
                grid=(n_halves, batch, Tp // tf),
                in_specs=[
                    pl.BlockSpec((hw, K), lambda h, b, j: (h, 0), **w_kwargs),
                    pl.BlockSpec((None, K, tf), lambda h, b, j: (b, 0, j)),
                ],
                out_specs=pl.BlockSpec((None, hw, tf), lambda h, b, j: (b, h, j)),
            ),
            compiler_params=pltpu.CompilerParams(
                dimension_semantics=("parallel", "parallel", "parallel"),
                vmem_limit_bytes=int(vmem_limit)),
        )

    try:
        out = build(1)(w_t, frames_t)   # single-buffered, VMEM-resident weights
    except Exception:
        out = build(2)(w_t, frames_t)   # fallback: default double-buffering

    re = out[:, :n_freq, :n_frames]
    im = out[:, Nr:Nr + n_freq, :n_frames]
    # TODO(synk): bf16 matmul inputs give ~1e-3 rel error vs f32 torch.stft;
    # use f32 operands if tighter parity is needed (2x weight bytes / FLOPs).
    return lax.complex(re, im)          # (batch, n_freq, n_frames) complex64


if __name__ == "__main__":
    key = jax.random.PRNGKey(0)
    batch, time = 2, 1024
    n_fft, n_hop = 256, 64

    x = jax.random.normal(key, (batch, time), dtype=jnp.float32)
    out = my_stft(x, n_fft=n_fft, n_hop=n_hop)
    out = jax.block_until_ready(out)

    n_frames = time // n_hop + 1
    n_freq = n_fft // 2 + 1
    assert out.shape == (batch, n_freq, n_frames), out.shape
    assert out.dtype == jnp.complex64, out.dtype

    # pure-JAX f32 reference of the same windowed one-sided DFT
    pad = n_fft // 2
    xp = jnp.pad(x, ((0, 0), (pad, pad)), mode="reflect")
    idx = jnp.arange(n_frames)[:, None] * n_hop + jnp.arange(n_fft)[None, :]
    frames = xp[:, idx]                                       # (batch, n_frames, n_fft)
    nn = jnp.arange(n_fft)
    window = 0.5 * (1.0 - jnp.cos(2.0 * jnp.pi * nn / n_fft))
    fr = jnp.arange(n_freq)
    ang = 2.0 * jnp.pi * fr[:, None] * nn[None, :] / n_fft
    wf = frames * window[None, None, :]
    ref_re = jnp.einsum("btn,fn->bft", wf, jnp.cos(ang))
    ref_im = jnp.einsum("btn,fn->bft", wf, -jnp.sin(ang))
    ref = lax.complex(ref_re, ref_im)

    err = float(jnp.max(jnp.abs(out - ref)) / jnp.max(jnp.abs(ref)))
    assert err < 2e-2, f"max relative error {err}"

    print("KERNEL_OK")
</pallas_src>

<mosaic_0001>
module attributes {stable_mosaic.version = 11 : i64} {
  func.func @_stft_kernel(%arg0: i32, %arg1: i32, %arg2: i32, %arg3: memref<136x256xbf16, #tpu.memory_space<vmem>>, %arg4: memref<1x256x128xbf16, #tpu.memory_space<vmem>>, %arg5: memref<1x136x128xf32, #tpu.memory_space<vmem>>) attributes {dimension_semantics = [#tpu.dimension_semantics<parallel>, #tpu.dimension_semantics<parallel>, #tpu.dimension_semantics<parallel>], iteration_bounds = array<i64: 2, 2, 1>, scalar_prefetch = 0 : i64, scratch_operands = 0 : i64, tpu.core_type = #tpu.core_type<tc>, window_params = [{pipeline_mode = #tpu.pipeline_mode<synchronous>, transform_indices = @transform_0, window_bounds = array<i64: 136, 256>}, {transform_indices = @transform_1, window_bounds = array<i64: 1, 256, 128>}, {transform_indices = @transform_2, window_bounds = array<i64: 1, 136, 128>}]} {
    %c0 = arith.constant 0 : index
    %c0_0 = arith.constant 0 : index
    %0 = vector.load %arg3[%c0, %c0_0] : memref<136x256xbf16, #tpu.memory_space<vmem>>, vector<136x256xbf16>
    %c0_1 = arith.constant 0 : index
    %c0_2 = arith.constant 0 : index
    %c0_3 = arith.constant 0 : index
    %1 = vector.load %arg4[%c0_1, %c0_2, %c0_3] : memref<1x256x128xbf16, #tpu.memory_space<vmem>>, vector<1x256x128xbf16>
    %2 = vector.shape_cast %1 : vector<1x256x128xbf16> to vector<256x128xbf16>
    %cst = arith.constant dense<0.000000e+00> : vector<136x128xf32>
    %3 = tpu.matmul %0, %2, %cst {dimension_numbers = #tpu.dot_dimension_numbers<[1], [0], [0], [1], [0, 0, 1, 1], [], []>} : vector<136x256xbf16>, vector<256x128xbf16>, vector<136x128xf32> -> vector<136x128xf32>
    %c0_4 = arith.constant 0 : index
    %c0_5 = arith.constant 0 : index
    %c0_6 = arith.constant 0 : index
    %4 = vector.load %arg5[%c0_4, %c0_5, %c0_6] : memref<1x136x128xf32, #tpu.memory_space<vmem>>, vector<1x136x128xf32>
    %5 = vector.shape_cast %4 : vector<1x136x128xf32> to vector<136x128xf32>
    %6 = vector.shape_cast %3 : vector<136x128xf32> to vector<1x136x128xf32>
    tpu.vector_store %arg5[%c0_4, %c0_5, %c0_6], %6 {strides = array<i32>} : memref<1x136x128xf32, #tpu.memory_space<vmem>>, vector<1x136x128xf32>,
    return
  }
  func.func @transform_0(%arg0: i32, %arg1: i32, %arg2: i32) -> (i32, i32) {
    %c0_i32 = arith.constant 0 : i32
    %c0_i32_0 = arith.constant 0 : i32
    return %arg0, %c0_i32 : i32, i32
  }
  func.func @transform_1(%arg0: i32, %arg1: i32, %arg2: i32) -> (i32, i32, i32) {
    %c0_i32 = arith.constant 0 : i32
    %c0_i32_0 = arith.constant 0 : i32
    return %arg1, %c0_i32, %arg2 : i32, i32, i32
  }
  func.func @transform_2(%arg0: i32, %arg1: i32, %arg2: i32) -> (i32, i32, i32) {
    %c0_i32 = arith.constant 0 : i32
    return %arg1, %arg0, %arg2 : i32, i32, i32
  }
}

module attributes {stable_mosaic.version = 11 : i64} {
  func.func @_stft_kernel(%arg0: i32, %arg1: i32, %arg2: i32, %arg3: memref<136x256xbf16, #tpu.memory_space<vmem>>, %arg4: memref<1x256x128xbf16, #tpu.memory_space<vmem>>, %arg5: memref<1x136x128xf32, #tpu.memory_space<vmem>>) attributes {dimension_semantics = [#tpu.dimension_semantics<parallel>, #tpu.dimension_semantics<parallel>, #tpu.dimension_semantics<parallel>], iteration_bounds = array<i64: 2, 2, 1>, scalar_prefetch = 0 : i64, scratch_operands = 0 : i64, tpu.core_type = #tpu.core_type<tc>, window_params = [{transform_indices = @transform_0, window_bounds = array<i64: 136, 256>}, {transform_indices = @transform_1, window_bounds = array<i64: 1, 256, 128>}, {transform_indices = @transform_2, window_bounds = array<i64: 1, 136, 128>}]} {
    %c0 = arith.constant 0 : index
    %c0_0 = arith.constant 0 : index
    %0 = vector.load %arg3[%c0, %c0_0] : memref<136x256xbf16, #tpu.memory_space<vmem>>, vector<136x256xbf16>
    %c0_1 = arith.constant 0 : index
    %c0_2 = arith.constant 0 : index
    %c0_3 = arith.constant 0 : index
    %1 = vector.load %arg4[%c0_1, %c0_2, %c0_3] : memref<1x256x128xbf16, #tpu.memory_space<vmem>>, vector<1x256x128xbf16>
    %2 = vector.shape_cast %1 : vector<1x256x128xbf16> to vector<256x128xbf16>
    %cst = arith.constant dense<0.000000e+00> : vector<136x128xf32>
    %3 = tpu.matmul %0, %2, %cst {dimension_numbers = #tpu.dot_dimension_numbers<[1], [0], [0], [1], [0, 0, 1, 1], [], []>} : vector<136x256xbf16>, vector<256x128xbf16>, vector<136x128xf32> -> vector<136x128xf32>
    %c0_4 = arith.constant 0 : index
    %c0_5 = arith.constant 0 : index
    %c0_6 = arith.constant 0 : index
    %4 = vector.load %arg5[%c0_4, %c0_5, %c0_6] : memref<1x136x128xf32, #tpu.memory_space<vmem>>, vector<1x136x128xf32>
    %5 = vector.shape_cast %4 : vector<1x136x128xf32> to vector<136x128xf32>
    %6 = vector.shape_cast %3 : vector<136x128xf32> to vector<1x136x128xf32>
    tpu.vector_store %arg5[%c0_4, %c0_5, %c0_6], %6 {strides = array<i32>} : memref<1x136x128xf32, #tpu.memory_space<vmem>>, vector<1x136x128xf32>,
    return
  }
  func.func @transform_0(%arg0: i32, %arg1: i32, %arg2: i32) -> (i32, i32) {
    %c0_i32 = arith.constant 0 : i32
    %c0_i32_0 = arith.constant 0 : i32
    return %arg0, %c0_i32 : i32, i32
  }
  func.func @transform_1(%arg0: i32, %arg1: i32, %arg2: i32) -> (i32, i32, i32) {
    %c0_i32 = arith.constant 0 : i32
    %c0_i32_0 = arith.constant 0 : i32
    return %arg1, %c0_i32, %arg2 : i32, i32, i32
  }
  func.func @transform_2(%arg0: i32, %arg1: i32, %arg2: i32) -> (i32, i32, i32) {
    %c0_i32 = arith.constant 0 : i32
    return %arg1, %arg0, %arg2 : i32, i32, i32
  }
}

</mosaic_0001>

<llo_original>
// kernel: tpu_custom_call.1
$region0: #{tpu_custom_call.1}
  #allocation0 [shape = 'u32[]', space=smem, size = 0x4, offset = 0x4, fixed_abs, tag = 'smem constant byte address 0x4 - core index']
  #allocation1 [shape = 'u32[144,128]{1,0:T(1,128)}', space=vmem, size = 0x12000, scoped, tag = 'internal scratch']
  %s0 = inlined_call_operand.hbm [shape: bf16[272,256], index: 0, kind: input, shape index: {}]
  %s1 = inlined_call_operand.hbm [shape: bf16[2,256,128], index: 1, kind: input, shape index: {}]
  %s2 = inlined_call_operand.hbm [shape: f32[2,272,128], index: 2, kind: output, shape index: {}]
  %s3 = sld [smem:[#allocation0]]
  $region49: #{tpu_custom_call.1} parent=0
    _
  %s5 = ssub.s32 1, %s3
  %s6 = scalar_select 0, %s5, %s3
  $region1: #{tpu_custom_call.1} parent=0
    #allocation2 [shape = 'u8[69632]{0}', space=vmem, size = 0x11000, scoped, tag = 'input window, operand 0, single buffered']
    #allocation3 [shape = 's32[2]{0}', space=sflag, size = 0x8, scoped, tag = 'scoped memory for tpu_custom_call.1']
    #allocation4 [shape = 's32[2]{0}', space=sflag, size = 0x8, scoped, tag = 'scoped memory for tpu_custom_call.1']
    #allocation5 [shape = 'u8[131072]{0}', space=vmem, size = 0x20000, scoped, tag = 'input window, operand 1']
    #allocation6 [shape = 's32[2]{0}', space=sflag, size = 0x8, scoped, tag = 'scoped memory for tpu_custom_call.1']
    #allocation7 [shape = 'u8[139264]{0}', space=vmem, size = 0x22000, scoped, tag = 'output window, operand 0']
    %7 = vsyncpa [#allocation3], 0
    %8 = vsyncpa [#allocation6], 0
    %s9 = scalar_lea.sflag [#allocation6], 1
    %10 = vsyncpa %s9, 0
    %11 = vsyncpa [#allocation4], 0
    %s12 = scalar_lea.sflag [#allocation4], 1
    %13 = vsyncpa %s12, 0
    loop: start=0, step=1, limit=6
    $region2: #{tpu_custom_call.1} parent=1 // loop_pre_header
      _
    $region3: #{tpu_custom_call.1} parent=1 // loop_header
      %s15 = sphi 0, %s19
      %p16 = scmp.ge.s32.totalorder %s15, 6
      %s22 = sphi 0, %s41
      %s23 = sphi 0, %s37
      %s24 = sphi 0, %s33
      %s25 = sphi 0, %s22
      %s26 = sphi 0, %s23
      %s27 = sphi 0, %s24
      %s28 = sphi 0, %s25
      %s29 = sphi 0, %s26
      %s30 = sphi 0, %s27
      %s44 = sphi 0, %s46
      %s47 = sphi 0, %s44
      %s48 = sphi 0, %s47
      %s64 = sphi 0, %s48
      %s72 = sphi 0, %s74
      %s75 = sphi 0, %s72
      %s76 = sphi 0, %s75
      %s92 = sphi 0, %s76
      %s102 = sphi 0, %s104
      %s105 = sphi 0, %s102
      %s106 = sphi 0, %s105
      %s122 = sphi 0, %s106
    $region4: #{tpu_custom_call.1} parent=1 // loop_header_branch
      %18 = sbr.rel (%p16) target = $region8
    $region5: #{tpu_custom_call.1} parent=1 // loop_body
      %s20 = ssub.s32 %s15, 1
      %s21 = ssub.s32 %s15, 2
      %s31 = sadd.s32 1, %s24
      %p32 = scmp.ge.s32.totalorder %s31, 1
      %s33 = scalar_select %p32, 0, %s31
      %s34 = sadd.s32 1, %s23
      %s35 = scalar_select %p32, %s34, %s23
      %p36 = scmp.ge.s32.totalorder %s35, 2
      %s37 = scalar_select %p36, 0, %s35
      %s38 = sadd.s32 1, %s22
      %s39 = scalar_select %p36, %s38, %s22
      %p40 = scmp.ge.s32.totalorder %s39, 2
      %s41 = scalar_select %p40, 0, %s39
      %s42 = ssub.s32 %s22, %s41
      %p43 = scmp.eq.s32.totalorder %s42, 0
      %s45 = sadd.s32 %s44, 1
      %s46 = scalar_select %p43, %s44, %s45
      %p49 = pneg %p43
      %p50 = scmp.eq.s32.totalorder %s15, 3
      %p51 = por %p49, %p50
      %p52 = scmp.ne.s32.totalorder %s44, %s47
      %p53 = scmp.eq.s32.totalorder %s15, 0
      %p54 = por %p52, %p53
      %p55 = scmp.ne.s32.totalorder %s44, %s47
      %p56 = scmp.eq.s32.totalorder %s20, 3
      %p57 = por %p55, %p56
      %p58 = scmp.ne.s32.totalorder %s47, %s48
      %p59 = scmp.eq.s32.totalorder %s20, 0
      %p60 = por %p58, %p59
      %p61 = scmp.ne.s32.totalorder %s47, %s48
      %p62 = scmp.eq.s32.totalorder %s21, 3
      %p63 = por %p61, %p62
      %p65 = scmp.ne.s32.totalorder %s48, %s64
      %p66 = scmp.eq.s32.totalorder %s21, 0
      %p67 = por %p65, %p66
      %s68 = ssub.s32 %s23, %s37
      %s69 = ssub.s32 %s24, %s33
      %s70 = sor.u32 %s68, %s69
      %p71 = scmp.eq.s32.totalorder %s70, 0
      %s73 = sadd.s32 %s72, 1
      %s74 = scalar_select %p71, %s72, %s73
      %p77 = pneg %p71
      %p78 = scmp.eq.s32.totalorder %s15, 3
      %p79 = por %p77, %p78
      %p80 = scmp.ne.s32.totalorder %s72, %s75
      %p81 = scmp.eq.s32.totalorder %s15, 0
      %p82 = por %p80, %p81
      %p83 = scmp.ne.s32.totalorder %s72, %s75
      %p84 = scmp.eq.s32.totalorder %s20, 3
      %p85 = por %p83, %p84
      %p86 = scmp.ne.s32.totalorder %s75, %s76
      %p87 = scmp.eq.s32.totalorder %s20, 0
      %p88 = por %p86, %p87
      %p89 = scmp.ne.s32.totalorder %s75, %s76
      %p90 = scmp.eq.s32.totalorder %s21, 3
      %p91 = por %p89, %p90
      %p93 = scmp.ne.s32.totalorder %s76, %s92
      %p94 = scmp.eq.s32.totalorder %s21, 0
      %p95 = por %p93, %p94
      %s96 = ssub.s32 %s23, %s37
      %s97 = ssub.s32 %s22, %s41
      %s98 = sor.u32 %s96, %s97
      %s99 = ssub.s32 %s24, %s33
      %s100 = sor.u32 %s98, %s99
      %p101 = scmp.eq.s32.totalorder %s100, 0
      %s103 = sadd.s32 %s102, 1
      %s104 = scalar_select %p101, %s102, %s103
      %p107 = pneg %p101
      %p108 = scmp.eq.s32.totalorder %s15, 3
      %p109 = por %p107, %p108
      %p110 = scmp.ne.s32.totalorder %s102, %s105
      %p111 = scmp.eq.s32.totalorder %s15, 0
      %p112 = por %p110, %p111
      %p113 = scmp.ne.s32.totalorder %s102, %s105
      %p114 = scmp.eq.s32.totalorder %s20, 3
      %p115 = por %p113, %p114
      %p116 = scmp.ne.s32.totalorder %s105, %s106
      %p117 = scmp.eq.s32.totalorder %s20, 0
      %p118 = por %p116, %p117
      %p119 = scmp.ne.s32.totalorder %s105, %s106
      %p120 = scmp.eq.s32.totalorder %s21, 3
      %p121 = por %p119, %p120
      %p123 = scmp.ne.s32.totalorder %s106, %s122
      %p124 = scmp.eq.s32.totalorder %s21, 0
      %p125 = por %p123, %p124
      %p126 = scmp.le.s32.totalorder 1, %s15
      %p127 = scmp.lt.s32.totalorder %s15, 5
      %p128 = pnand %p126, %p127
      %p129 = pneg %p128
      // Predicated region
      $region9: #{tpu_custom_call.1} parent=5 // pred_check
        _
      $region10: #{tpu_custom_call.1} parent=5 // pred_check_branch
        %131 = sbr.rel (%p128) target = $region12
      $region11: #{tpu_custom_call.1} parent=5 // pred_region
        %s132 = ssub.s32 %s15, 1
        // Predicated region
        $region13: #{tpu_custom_call.1} parent=11 // pred_check
          %p133 = pneg %p60
        $region14: #{tpu_custom_call.1} parent=11 // pred_check_branch
          %135 = sbr.rel (%p133) target = $region16
        $region15: #{tpu_custom_call.1} parent=11 // pred_region
          %s136 = smul.u32 17, %s25
          %s138 = ssub.s32 2176, 2176
          %139 = vsyncadd [#allocation3], %s138
          %s140 = smul.addr %s136, 2
          %s141 = smul.addr %s140, 64
          %s142 = scalar_lea.hbm %s0, %s141
          %s143 = sshll.u32 [#allocation2], 4
          %s144 = int_to_ptr.vmem [resolvable:$true] %s143
          %149 = dma.hbm_to_vmem [thread:$0]  %s142, 2176, %s144, [#allocation3], 128, 128, 8
        $region16: #{tpu_custom_call.1} parent=11 // pred_fallthru
          _
      $region12: #{tpu_custom_call.1} parent=5 // pred_fallthru
        _
      %p150 = scmp.lt.s32.totalorder %s15, 4
      // Predicated region
      $region17: #{tpu_custom_call.1} parent=5 // pred_check
        %p151 = pneg %p150
      $region18: #{tpu_custom_call.1} parent=5 // pred_check_branch
        %153 = sbr.rel (%p151) target = $region20
      $region19: #{tpu_custom_call.1} parent=5 // pred_region
        // Predicated region
        $region21: #{tpu_custom_call.1} parent=19 // pred_check
          %p154 = pneg %p82
        $region22: #{tpu_custom_call.1} parent=19 // pred_check_branch
          %156 = sbr.rel (%p154) target = $region24
        $region23: #{tpu_custom_call.1} parent=19 // pred_region
          %s157 = sand.u32 %s72, 1
          %s158 = scalar_lea.sflag [#allocation6], %s157
          %s159 = sand.u32 %s72, 1
          %s160 = smul.addr %s159, 128
          %s161 = scalar_lea.vmem [#allocation5], %s160
          %s163 = ssub.s32 2048, 2048
          %164 = vsyncadd %s158, %s163
          %s165 = smul.addr %s23, 32
          %s166 = sadd.s32 %s24, %s165
          %s167 = smul.addr %s166, 64
          %s168 = scalar_lea.hbm %s1, %s167
          %s169 = sshll.u32 %s161, 4
          %s170 = int_to_ptr.vmem [resolvable:$true] %s169
          %175 = dma.hbm_to_vmem [thread:$0]  %s168, 2048, %s170, %s158, 64, 64, 4
        $region24: #{tpu_custom_call.1} parent=19 // pred_fallthru
          _
      $region20: #{tpu_custom_call.1} parent=5 // pred_fallthru
        _
      %p176 = scmp.le.s32.totalorder 1, %s15
      %p177 = scmp.lt.s32.totalorder %s15, 5
      %p178 = pnand %p176, %p177
      %p179 = pneg %p178
      // Predicated region
      $region25: #{tpu_custom_call.1} parent=5 // pred_check
        _
      $region26: #{tpu_custom_call.1} parent=5 // pred_check_branch
        %181 = sbr.rel (%p178) target = $region28
      $region27: #{tpu_custom_call.1} parent=5 // pred_region
        %s182 = ssub.s32 %s15, 1
        // Predicated region
        $region29: #{tpu_custom_call.1} parent=27 // pred_check
          %p183 = pneg %p60
        $region30: #{tpu_custom_call.1} parent=27 // pred_check_branch
          %185 = sbr.rel (%p183) target = $region32
        $region31: #{tpu_custom_call.1} parent=27 // pred_region
          %186 = dma.done [#allocation3], 2176
        $region32: #{tpu_custom_call.1} parent=27 // pred_fallthru
          _
        %s187 = sand.u32 %s75, 1
        %s188 = scalar_lea.sflag [#allocation6], %s187
        %s189 = sand.u32 %s75, 1
        %s190 = smul.addr %s189, 128
        %s191 = scalar_lea.vmem [#allocation5], %s190
        // Predicated region
        $region33: #{tpu_custom_call.1} parent=27 // pred_check
          %p192 = pneg %p88
        $region34: #{tpu_custom_call.1} parent=27 // pred_check_branch
          %194 = sbr.rel (%p192) target = $region36
        $region35: #{tpu_custom_call.1} parent=27 // pred_region
          %195 = dma.done %s188, 2048
        $region36: #{tpu_custom_call.1} parent=27 // pred_fallthru
          _
        %p196 = pneg %p60
        %p197 = pneg %p57
        %s198 = sand.u32 %s75, 1
        %s199 = scalar_lea.sflag [#allocation6], %s198
        %s200 = sand.u32 %s75, 1
        %s201 = smul.addr %s200, 128
        %s202 = scalar_lea.vmem [#allocation5], %s201
        %p203 = pneg %p88
        %p204 = pneg %p85
        %p205 = pneg %p118
        %p206 = pneg %p115
        %s207 = sand.u32 %s105, 1
        %s208 = scalar_lea.sflag [#allocation4], %s207
        %s209 = sand.u32 %s105, 1
        %s210 = smul.addr %s209, 136
        %s211 = scalar_lea.vmem [#allocation7], %s210
        %s212 = smul.u32 17, %s25
        %s213 = smul.u32 17, %s25
        %v215 = vld [vmem:[#allocation2] sm:$0xff]
        %v216 = vld [vmem:[#allocation2 + $0x8] sm:$0xff]
        %v217 = vld [vmem:[#allocation2 + $0x10] sm:$0xff]
        %v218 = vld [vmem:[#allocation2 + $0x18] sm:$0xff]
        %v219 = vld [vmem:[#allocation2 + $0x20] sm:$0xff]
        %v220 = vld [vmem:[#allocation2 + $0x28] sm:$0xff]
        %v221 = vld [vmem:[#allocation2 + $0x30] sm:$0xff]
        %v222 = vld [vmem:[#allocation2 + $0x38] sm:$0xff]
        %v223 = vld [vmem:[#allocation2 + $0x40] sm:$0xff]
        %v224 = vld [vmem:[#allocation2 + $0x48] sm:$0xff]
        %v225 = vld [vmem:[#allocation2 + $0x50] sm:$0xff]
        %v226 = vld [vmem:[#allocation2 + $0x58] sm:$0xff]
        %v227 = vld [vmem:[#allocation2 + $0x60] sm:$0xff]
        %v228 = vld [vmem:[#allocation2 + $0x68] sm:$0xff]
        %v229 = vld [vmem:[#allocation2 + $0x70] sm:$0xff]
        %v230 = vld [vmem:[#allocation2 + $0x78] sm:$0xff]
        %v231 = vld [vmem:[#allocation2 + $0x80] sm:$0xff]
        %v232 = vld [vmem:[%s191] sm:$0xf]
        %v233 = vld [vmem:[%s191 + $0x4] sm:$0xf]
        %v234 = vld [vmem:[%s191 + $0x8] sm:$0xf]
        %v235 = vld [vmem:[%s191 + $0xc] sm:$0xf]
        %v236 = vld [vmem:[%s191 + $0x10] sm:$0xf]
        %v237 = vld [vmem:[%s191 + $0x14] sm:$0xf]
        %v238 = vld [vmem:[%s191 + $0x18] sm:$0xf]
        %v239 = vld [vmem:[%s191 + $0x1c] sm:$0xf]
        %v240 = vld [vmem:[%s191 + $0x20] sm:$0xf]
        %v241 = vld [vmem:[%s191 + $0x24] sm:$0xf]
        %v242 = vld [vmem:[%s191 + $0x28] sm:$0xf]
        %v243 = vld [vmem:[%s191 + $0x2c] sm:$0xf]
        %v244 = vld [vmem:[%s191 + $0x30] sm:$0xf]
        %v245 = vld [vmem:[%s191 + $0x34] sm:$0xf]
        %v246 = vld [vmem:[%s191 + $0x38] sm:$0xf]
        %v247 = vld [vmem:[%s191 + $0x3c] sm:$0xf]
        %v248 = vld [vmem:[%s191 + $0x40] sm:$0xf]
        %v249 = vld [vmem:[%s191 + $0x44] sm:$0xf]
        %v250 = vld [vmem:[%s191 + $0x48] sm:$0xf]
        %v251 = vld [vmem:[%s191 + $0x4c] sm:$0xf]
        %v252 = vld [vmem:[%s191 + $0x50] sm:$0xf]
        %v253 = vld [vmem:[%s191 + $0x54] sm:$0xf]
        %v254 = vld [vmem:[%s191 + $0x58] sm:$0xf]
        %v255 = vld [vmem:[%s191 + $0x5c] sm:$0xf]
        %v256 = vld [vmem:[%s191 + $0x60] sm:$0xf]
        %v257 = vld [vmem:[%s191 + $0x64] sm:$0xf]
        %v258 = vld [vmem:[%s191 + $0x68] sm:$0xf]
        %v259 = vld [vmem:[%s191 + $0x6c] sm:$0xf]
        %v260 = vld [vmem:[%s191 + $0x70] sm:$0xf]
        %v261 = vld [vmem:[%s191 + $0x74] sm:$0xf]
        %v262 = vld [vmem:[%s191 + $0x78] sm:$0xf]
        %v263 = vld [vmem:[%s191 + $0x7c] sm:$0xf]
        %v281 = vunpack.c.l.b16 %v215
        %v282 = vunpack.c.h.b16 %v215
        %v283 = vunpack.c.l.b16 %v216
        %v284 = vunpack.c.h.b16 %v216
        %v285 = vunpack.c.l.b16 %v217
        %v286 = vunpack.c.h.b16 %v217
        %v287 = vunpack.c.l.b16 %v218
        %v288 = vunpack.c.h.b16 %v218
        %v289 = vunpack.c.l.b16 %v219
        %v290 = vunpack.c.h.b16 %v219
        %v291 = vunpack.c.l.b16 %v220
        %v292 = vunpack.c.h.b16 %v220
        %v293 = vunpack.c.l.b16 %v221
        %v294 = vunpack.c.h.b16 %v221
        %v295 = vunpack.c.l.b16 %v222
        %v296 = vunpack.c.h.b16 %v222
        %v297 = vunpack.c.l.b16 %v223
        %v298 = vunpack.c.h.b16 %v223
        %v299 = vunpack.c.l.b16 %v224
        %v300 = vunpack.c.h.b16 %v224
        %v301 = vunpack.c.l.b16 %v225
        %v302 = vunpack.c.h.b16 %v225
        %v303 = vunpack.c.l.b16 %v226
        %v304 = vunpack.c.h.b16 %v226
        %v305 = vunpack.c.l.b16 %v227
        %v306 = vunpack.c.h.b16 %v227
        %v307 = vunpack.c.l.b16 %v228
        %v308 = vunpack.c.h.b16 %v228
        %v309 = vunpack.c.l.b16 %v229
        %v310 = vunpack.c.h.b16 %v229
        %v311 = vunpack.c.l.b16 %v230
        %v312 = vunpack.c.h.b16 %v230
        %v313 = vunpack.c.l.b16 %v231
        %v314 = vunpack.c.h.b16 %v231
        %v315 = vpack.c.b16 %v283, %v281
        %v316 = vpack.c.b16 %v284, %v282
        %v317 = vpack.c.b16 %v287, %v285
        %v318 = vpack.c.b16 %v288, %v286
        %v319 = vpack.c.b16 %v291, %v289
        %v320 = vpack.c.b16 %v292, %v290
        %v321 = vpack.c.b16 %v295, %v293
        %v322 = vpack.c.b16 %v296, %v294
        %v323 = vpack.c.b16 %v299, %v297
        %v324 = vpack.c.b16 %v300, %v298
        %v325 = vpack.c.b16 %v303, %v301
        %v326 = vpack.c.b16 %v304, %v302
        %v327 = vpack.c.b16 %v307, %v305
        %v328 = vpack.c.b16 %v308, %v306
        %v329 = vpack.c.b16 %v311, %v309
        %v330 = vpack.c.b16 %v312, %v310
        %v331 = vpack.c.b16 %v313, %v313
        %v332 = vpack.c.b16 %v314, %v314
        %v383 = vunpack.c.l.b16 %v232
        %v384 = vunpack.c.l.b16 %v233
        %v385 = vunpack.c.l.b16 %v234
        %v386 = vunpack.c.l.b16 %v235
        %v387 = vunpack.c.l.b16 %v236
        %v388 = vunpack.c.l.b16 %v237
        %v389 = vunpack.c.l.b16 %v238
        %v390 = vunpack.c.l.b16 %v239
        %v391 = vunpack.c.l.b16 %v240
        %v392 = vunpack.c.l.b16 %v241
        %v393 = vunpack.c.l.b16 %v242
        %v394 = vunpack.c.l.b16 %v243
        %v395 = vunpack.c.l.b16 %v244
        %v396 = vunpack.c.l.b16 %v245
        %v397 = vunpack.c.l.b16 %v246
        %v398 = vunpack.c.l.b16 %v247
        %v399 = vunpack.c.l.b16 %v248
        %v400 = vunpack.c.l.b16 %v249
        %v401 = vunpack.c.l.b16 %v250
        %v402 = vunpack.c.l.b16 %v251
        %v403 = vunpack.c.l.b16 %v252
        %v404 = vunpack.c.l.b16 %v253
        %v405 = vunpack.c.l.b16 %v254
        %v406 = vunpack.c.l.b16 %v255
        %v407 = vunpack.c.l.b16 %v256
        %v408 = vunpack.c.l.b16 %v257
        %v409 = vunpack.c.l.b16 %v258
        %v410 = vunpack.c.l.b16 %v259
        %v411 = vunpack.c.l.b16 %v260
        %v412 = vunpack.c.l.b16 %v261
        %v413 = vunpack.c.l.b16 %v262
        %v414 = vunpack.c.l.b16 %v263
        %v415 = vpack.c.b16 %v384, %v383
        %v416 = vpack.c.b16 %v386, %v385
        %v417 = vpack.c.b16 %v388, %v387
        %v418 = vpack.c.b16 %v390, %v389
        %v419 = vpack.c.b16 %v392, %v391
        %v420 = vpack.c.b16 %v394, %v393
        %v421 = vpack.c.b16 %v396, %v395
        %v422 = vpack.c.b16 %v398, %v397
        %v423 = vpack.c.b16 %v400, %v399
        %v424 = vpack.c.b16 %v402, %v401
        %v425 = vpack.c.b16 %v404, %v403
        %v426 = vpack.c.b16 %v406, %v405
        %v427 = vpack.c.b16 %v408, %v407
        %v428 = vpack.c.b16 %v410, %v409
        %v429 = vpack.c.b16 %v412, %v411
        %v430 = vpack.c.b16 %v414, %v413
        %447 = vmatprep.subr.bf16.mxu0 0
        %448 = vmatpush1.bf16.msra.mxu0 %v415
        %449 = vmatprep.subr.bf16.mxu0 0
        %450 = vmatpush1.bf16.msra.mxu0 %v416
        %451 = vmatprep.subr.bf16.mxu0 0
        %452 = vmatpush1.bf16.msra.mxu0 %v417
        %453 = vmatprep.subr.bf16.mxu0 0
        %454 = vmatpush1.bf16.msra.mxu0 %v418
        %455 = vmatprep.subr.bf16.mxu0 0
        %456 = vmatpush1.bf16.msra.mxu0 %v419
        %457 = vmatprep.subr.bf16.mxu0 0
        %458 = vmatpush1.bf16.msra.mxu0 %v420
        %459 = vmatprep.subr.bf16.mxu0 0
        %460 = vmatpush1.bf16.msra.mxu0 %v421
        %461 = vmatprep.subr.bf16.mxu0 0
        %462 = vmatpush1.bf16.msra.mxu0 %v422
        %463 = vmatprep.subr.bf16.mxu0 0
        %464 = vmatpush1.bf16.msra.mxu0 %v423
        %465 = vmatprep.subr.bf16.mxu0 0
        %466 = vmatpush1.bf16.msra.mxu0 %v424
        %467 = vmatprep.subr.bf16.mxu0 0
        %468 = vmatpush1.bf16.msra.mxu0 %v425
        %469 = vmatprep.subr.bf16.mxu0 0
        %470 = vmatpush1.bf16.msra.mxu0 %v426
        %471 = vmatprep.subr.bf16.mxu0 0
        %472 = vmatpush1.bf16.msra.mxu0 %v427
        %473 = vmatprep.subr.bf16.mxu0 0
        %474 = vmatpush1.bf16.msra.mxu0 %v428
        %475 = vmatprep.subr.bf16.mxu0 0
        %476 = vmatpush1.bf16.msra.mxu0 %v429
        %477 = vmatprep.subr.bf16.mxu0 0
        %478 = vmatpush1.bf16.msra.mxu0 %v430
        %479 = vmatprep.mubr.bf16.mxu0 %v316
        %480 = vmatmul.mubr.bf16.gmra.mrb[0].mxu0 %v315
        %v481 = vpop.f32.mrb[0].mxu0
        %v482 = vadd.f32 0.0, %v481
        %v483 = vpop.f32.mrb[0].mxu0
        %v484 = vpop.f32.mrb[0].mxu0
        %v485 = vadd.f32 0.0, %v484
        %v486 = vpop.f32.mrb[0].mxu0
        %487 = vmatprep.mubr.bf16.mxu0 %v318
        %488 = vmatmul.mubr.bf16.gmra.mrb[0].mxu0 %v317
        %v489 = vpop.f32.mrb[0].mxu0
        %v490 = vadd.f32 0.0, %v489
        %v491 = vpop.f32.mrb[0].mxu0
        %v492 = vpop.f32.mrb[0].mxu0
        %v493 = vadd.f32 0.0, %v492
        %v494 = vpop.f32.mrb[0].mxu0
        %495 = vmatprep.mubr.bf16.mxu0 %v320
        %496 = vmatmul.mubr.bf16.gmra.mrb[0].mxu0 %v319
        %v497 = vpop.f32.mrb[0].mxu0
        %v498 = vadd.f32 0.0, %v497
        %v499 = vpop.f32.mrb[0].mxu0
        %v500 = vpop.f32.mrb[0].mxu0
        %v501 = vadd.f32 0.0, %v500
        %v502 = vpop.f32.mrb[0].mxu0
        %503 = vmatprep.mubr.bf16.mxu0 %v322
        %504 = vmatmul.mubr.bf16.gmra.mrb[0].mxu0 %v321
        %v505 = vpop.f32.mrb[0].mxu0
        %v506 = vadd.f32 0.0, %v505
        %v507 = vpop.f32.mrb[0].mxu0
        %v508 = vpop.f32.mrb[0].mxu0
        %v509 = vadd.f32 0.0, %v508
        %v510 = vpop.f32.mrb[0].mxu0
        %511 = vmatprep.mubr.bf16.mxu0 %v324
        %512 = vmatmul.mubr.bf16.gmra.mrb[0].mxu0 %v323
        %v513 = vpop.f32.mrb[0].mxu0
        %v514 = vadd.f32 0.0, %v513
        %v515 = vpop.f32.mrb[0].mxu0
        %v516 = vpop.f32.mrb[0].mxu0
        %v517 = vadd.f32 0.0, %v516
        %v518 = vpop.f32.mrb[0].mxu0
        %519 = vmatprep.mubr.bf16.mxu0 %v326
        %520 = vmatmul.mubr.bf16.gmra.mrb[0].mxu0 %v325
        %v521 = vpop.f32.mrb[0].mxu0
        %v522 = vadd.f32 0.0, %v521
        %v523 = vpop.f32.mrb[0].mxu0
        %v524 = vpop.f32.mrb[0].mxu0
        %v525 = vadd.f32 0.0, %v524
        %v526 = vpop.f32.mrb[0].mxu0
        %527 = vmatprep.mubr.bf16.mxu0 %v328
        %528 = vmatmul.mubr.bf16.gmra.mrb[0].mxu0 %v327
        %v529 = vpop.f32.mrb[0].mxu0
        %v530 = vadd.f32 0.0, %v529
        %v531 = vpop.f32.mrb[0].mxu0
        %v532 = vpop.f32.mrb[0].mxu0
        %v533 = vadd.f32 0.0, %v532
        %v534 = vpop.f32.mrb[0].mxu0
        %535 = vmatprep.mubr.bf16.mxu0 %v330
        %536 = vmatmul.mubr.bf16.gmra.mrb[0].mxu0 %v329
        %v537 = vpop.f32.mrb[0].mxu0
        %v538 = vadd.f32 0.0, %v537
        %v539 = vpop.f32.mrb[0].mxu0
        %v540 = vpop.f32.mrb[0].mxu0
        %v541 = vadd.f32 0.0, %v540
        %v542 = vpop.f32.mrb[0].mxu0
        %543 = vmatprep.mubr.bf16.mxu0 %v332
        %544 = vmatmul.mubr.bf16.gmra.mrb[0].mxu0 %v331
        %v545 = vpop.f32.mrb[0].mxu0
        %v546 = vadd.f32 0.0, %v545
        %v547 = vpop.f32.mrb[0].mxu0
        %v548 = vpop.f32.mrb[0].mxu0
        %v549 = vpop.f32.mrb[0].mxu0
        %550 = vdwg.mxu0
        %551 = vst [vmem:[%s211] sm:$0xff] %v482
        %552 = vst [vmem:[%s211 + $0x8] sm:$0xff] %v485
        %553 = vst [vmem:[%s211 + $0x10] sm:$0xff] %v490
        %554 = vst [vmem:[%s211 + $0x18] sm:$0xff] %v493
        %555 = vst [vmem:[%s211 + $0x20] sm:$0xff] %v498
        %556 = vst [vmem:[%s211 + $0x28] sm:$0xff] %v501
        %557 = vst [vmem:[%s211 + $0x30] sm:$0xff] %v506
        %558 = vst [vmem:[%s211 + $0x38] sm:$0xff] %v509
        %559 = vst [vmem:[%s211 + $0x40] sm:$0xff] %v514
        %560 = vst [vmem:[%s211 + $0x48] sm:$0xff] %v517
        %561 = vst [vmem:[%s211 + $0x50] sm:$0xff] %v522
        %562 = vst [vmem:[%s211 + $0x58] sm:$0xff] %v525
        %563 = vst [vmem:[%s211 + $0x60] sm:$0xff] %v530
        %564 = vst [vmem:[%s211 + $0x68] sm:$0xff] %v533
        %565 = vst [vmem:[%s211 + $0x70] sm:$0xff] %v538
        %566 = vst [vmem:[%s211 + $0x78] sm:$0xff] %v541
        %567 = vst [vmem:[%s211 + $0x80] sm:$0xff] %v546
        %s568 = sand.u32 %s105, 1
        %s569 = scalar_lea.sflag [#allocation4], %s568
        %s570 = sand.u32 %s105, 1
        %s571 = smul.addr %s570, 136
        %s572 = scalar_lea.vmem [#allocation7], %s571
        // Predicated region
        $region37: #{tpu_custom_call.1} parent=27 // pred_check
          %p573 = pneg %p115
        $region38: #{tpu_custom_call.1} parent=27 // pred_check_branch
          %575 = sbr.rel (%p573) target = $region40
        $region39: #{tpu_custom_call.1} parent=27 // pred_region
          %s576 = smul.u32 17, %s25
          %s578 = ssub.s32 2176, 2176
          %579 = vsyncadd %s569, %s578
          %s580 = sadd.s32 %s27, %s576
          %s581 = smul.addr %s26, 34
          %s582 = sadd.s32 %s580, %s581
          %s583 = smul.addr %s582, 128
          %s584 = scalar_lea.hbm %s2, %s583
          %s585 = sshll.u32 %s572, 4
          %s586 = int_to_ptr.vmem [resolvable:$true] %s585
          %591 = dma.vmem_to_hbm [thread:$0]  %s586, 2176, %s584, %s569, 128, 128, 8
        $region40: #{tpu_custom_call.1} parent=27 // pred_fallthru
          _
      $region28: #{tpu_custom_call.1} parent=5 // pred_fallthru
        _
      %p592 = scmp.le.s32.totalorder 2, %s15
      // Predicated region
      $region41: #{tpu_custom_call.1} parent=5 // pred_check
        %p593 = pneg %p592
      $region42: #{tpu_custom_call.1} parent=5 // pred_check_branch
        %595 = sbr.rel (%p593) target = $region44
      $region43: #{tpu_custom_call.1} parent=5 // pred_region
        %s596 = ssub.s32 %s15, 2
        // Predicated region
        $region45: #{tpu_custom_call.1} parent=43 // pred_check
          %p597 = pneg %p121
        $region46: #{tpu_custom_call.1} parent=43 // pred_check_branch
          %599 = sbr.rel (%p597) target = $region48
        $region47: #{tpu_custom_call.1} parent=43 // pred_region
          %s600 = sand.u32 %s106, 1
          %s601 = scalar_lea.sflag [#allocation4], %s600
          %s602 = sand.u32 %s106, 1
          %s603 = smul.addr %s602, 136
          %s604 = scalar_lea.vmem [#allocation7], %s603
          %605 = dma.done %s601, 2176
        $region48: #{tpu_custom_call.1} parent=43 // pred_fallthru
          _
      $region44: #{tpu_custom_call.1} parent=5 // pred_fallthru
        _
    $region6: #{tpu_custom_call.1} parent=1 // loop_footer
      %s19 = sadd.s32 1, %s15
    $region7: #{tpu_custom_call.1} parent=1 // loop_footer_branch
      %14 = sbr.rel target = $region3
    $region8: #{tpu_custom_call.1} parent=1 // loop_exit
      _
    %606 = vsyncpa [#allocation3], 1
    %s607 = scalar_lea.sflag [#allocation3], 1
    %608 = vsyncpa %s607, 1
    %609 = vsyncpa [#allocation6], 1
    %s610 = scalar_lea.sflag [#allocation6], 1
    %611 = vsyncpa %s610, 1
    %612 = vsyncpa [#allocation4], 1
    %s613 = scalar_lea.sflag [#allocation4], 1
    %614 = vsyncpa %s613, 1

// kernel: tpu_custom_call.1
$region0: #{tpu_custom_call.1}
  #allocation0 [shape = 'u32[]', space=smem, size = 0x4, offset = 0x4, fixed_abs, tag = 'smem constant byte address 0x4 - core index']
  #allocation1 [shape = 'u32[144,128]{1,0:T(1,128)}', space=vmem, size = 0x12000, scoped, tag = 'internal scratch']
  %s0 = inlined_call_operand.hbm [shape: bf16[272,256], index: 0, kind: input, shape index: {}]
  %s1 = inlined_call_operand.hbm [shape: bf16[2,256,128], index: 1, kind: input, shape index: {}]
  %s2 = inlined_call_operand.hbm [shape: f32[2,272,128], index: 2, kind: output, shape index: {}]
  %s3 = sld [smem:[#allocation0]]
  $region49: #{tpu_custom_call.1} parent=0
    _
  %s5 = ssub.s32 1, %s3
  %s6 = scalar_select 0, %s5, %s3
  $region1: #{tpu_custom_call.1} parent=0
    #allocation2 [shape = 'u8[139264]{0}', space=vmem, size = 0x22000, scoped, tag = 'input window, operand 0']
    #allocation3 [shape = 's32[2]{0}', space=sflag, size = 0x8, scoped, tag = 'scoped memory for tpu_custom_call.1']
    #allocation4 [shape = 's32[2]{0}', space=sflag, size = 0x8, scoped, tag = 'scoped memory for tpu_custom_call.1']
    #allocation5 [shape = 'u8[131072]{0}', space=vmem, size = 0x20000, scoped, tag = 'input window, operand 1']
    #allocation6 [shape = 's32[2]{0}', space=sflag, size = 0x8, scoped, tag = 'scoped memory for tpu_custom_call.1']
    #allocation7 [shape = 'u8[139264]{0}', space=vmem, size = 0x22000, scoped, tag = 'output window, operand 0']
    %7 = vsyncpa [#allocation3], 0
    %s8 = scalar_lea.sflag [#allocation3], 1
    %9 = vsyncpa %s8, 0
    %10 = vsyncpa [#allocation6], 0
    %s11 = scalar_lea.sflag [#allocation6], 1
    %12 = vsyncpa %s11, 0
    %13 = vsyncpa [#allocation4], 0
    %s14 = scalar_lea.sflag [#allocation4], 1
    %15 = vsyncpa %s14, 0
    loop: start=0, step=1, limit=6
    $region2: #{tpu_custom_call.1} parent=1 // loop_pre_header
      _
    $region3: #{tpu_custom_call.1} parent=1 // loop_header
      %s17 = sphi 0, %s21
      %p18 = scmp.ge.s32.totalorder %s17, 6
      %s24 = sphi 0, %s43
      %s25 = sphi 0, %s39
      %s26 = sphi 0, %s35
      %s27 = sphi 0, %s24
      %s28 = sphi 0, %s25
      %s29 = sphi 0, %s26
      %s30 = sphi 0, %s27
      %s31 = sphi 0, %s28
      %s32 = sphi 0, %s29
      %s46 = sphi 0, %s48
      %s49 = sphi 0, %s46
      %s50 = sphi 0, %s49
      %s66 = sphi 0, %s50
      %s74 = sphi 0, %s76
      %s77 = sphi 0, %s74
      %s78 = sphi 0, %s77
      %s94 = sphi 0, %s78
      %s104 = sphi 0, %s106
      %s107 = sphi 0, %s104
      %s108 = sphi 0, %s107
      %s124 = sphi 0, %s108
    $region4: #{tpu_custom_call.1} parent=1 // loop_header_branch
      %20 = sbr.rel (%p18) target = $region8
    $region5: #{tpu_custom_call.1} parent=1 // loop_body
      %s22 = ssub.s32 %s17, 1
      %s23 = ssub.s32 %s17, 2
      %s33 = sadd.s32 1, %s26
      %p34 = scmp.ge.s32.totalorder %s33, 1
      %s35 = scalar_select %p34, 0, %s33
      %s36 = sadd.s32 1, %s25
      %s37 = scalar_select %p34, %s36, %s25
      %p38 = scmp.ge.s32.totalorder %s37, 2
      %s39 = scalar_select %p38, 0, %s37
      %s40 = sadd.s32 1, %s24
      %s41 = scalar_select %p38, %s40, %s24
      %p42 = scmp.ge.s32.totalorder %s41, 2
      %s43 = scalar_select %p42, 0, %s41
      %s44 = ssub.s32 %s24, %s43
      %p45 = scmp.eq.s32.totalorder %s44, 0
      %s47 = sadd.s32 %s46, 1
      %s48 = scalar_select %p45, %s46, %s47
      %p51 = pneg %p45
      %p52 = scmp.eq.s32.totalorder %s17, 3
      %p53 = por %p51, %p52
      %p54 = scmp.ne.s32.totalorder %s46, %s49
      %p55 = scmp.eq.s32.totalorder %s17, 0
      %p56 = por %p54, %p55
      %p57 = scmp.ne.s32.totalorder %s46, %s49
      %p58 = scmp.eq.s32.totalorder %s22, 3
      %p59 = por %p57, %p58
      %p60 = scmp.ne.s32.totalorder %s49, %s50
      %p61 = scmp.eq.s32.totalorder %s22, 0
      %p62 = por %p60, %p61
      %p63 = scmp.ne.s32.totalorder %s49, %s50
      %p64 = scmp.eq.s32.totalorder %s23, 3
      %p65 = por %p63, %p64
      %p67 = scmp.ne.s32.totalorder %s50, %s66
      %p68 = scmp.eq.s32.totalorder %s23, 0
      %p69 = por %p67, %p68
      %s70 = ssub.s32 %s25, %s39
      %s71 = ssub.s32 %s26, %s35
      %s72 = sor.u32 %s70, %s71
      %p73 = scmp.eq.s32.totalorder %s72, 0
      %s75 = sadd.s32 %s74, 1
      %s76 = scalar_select %p73, %s74, %s75
      %p79 = pneg %p73
      %p80 = scmp.eq.s32.totalorder %s17, 3
      %p81 = por %p79, %p80
      %p82 = scmp.ne.s32.totalorder %s74, %s77
      %p83 = scmp.eq.s32.totalorder %s17, 0
      %p84 = por %p82, %p83
      %p85 = scmp.ne.s32.totalorder %s74, %s77
      %p86 = scmp.eq.s32.totalorder %s22, 3
      %p87 = por %p85, %p86
      %p88 = scmp.ne.s32.totalorder %s77, %s78
      %p89 = scmp.eq.s32.totalorder %s22, 0
      %p90 = por %p88, %p89
      %p91 = scmp.ne.s32.totalorder %s77, %s78
      %p92 = scmp.eq.s32.totalorder %s23, 3
      %p93 = por %p91, %p92
      %p95 = scmp.ne.s32.totalorder %s78, %s94
      %p96 = scmp.eq.s32.totalorder %s23, 0
      %p97 = por %p95, %p96
      %s98 = ssub.s32 %s25, %s39
      %s99 = ssub.s32 %s24, %s43
      %s100 = sor.u32 %s98, %s99
      %s101 = ssub.s32 %s26, %s35
      %s102 = sor.u32 %s100, %s101
      %p103 = scmp.eq.s32.totalorder %s102, 0
      %s105 = sadd.s32 %s104, 1
      %s106 = scalar_select %p103, %s104, %s105
      %p109 = pneg %p103
      %p110 = scmp.eq.s32.totalorder %s17, 3
      %p111 = por %p109, %p110
      %p112 = scmp.ne.s32.totalorder %s104, %s107
      %p113 = scmp.eq.s32.totalorder %s17, 0
      %p114 = por %p112, %p113
      %p115 = scmp.ne.s32.totalorder %s104, %s107
      %p116 = scmp.eq.s32.totalorder %s22, 3
      %p117 = por %p115, %p116
      %p118 = scmp.ne.s32.totalorder %s107, %s108
      %p119 = scmp.eq.s32.totalorder %s22, 0
      %p120 = por %p118, %p119
      %p121 = scmp.ne.s32.totalorder %s107, %s108
      %p122 = scmp.eq.s32.totalorder %s23, 3
      %p123 = por %p121, %p122
      %p125 = scmp.ne.s32.totalorder %s108, %s124
      %p126 = scmp.eq.s32.totalorder %s23, 0
      %p127 = por %p125, %p126
      %p128 = scmp.le.s32.totalorder 1, %s17
      %p129 = scmp.lt.s32.totalorder %s17, 5
      %p130 = pnand %p128, %p129
      %p131 = pneg %p130
      // Predicated region
      $region9: #{tpu_custom_call.1} parent=5 // pred_check
        _
      $region10: #{tpu_custom_call.1} parent=5 // pred_check_branch
        %133 = sbr.rel (%p130) target = $region12
      $region11: #{tpu_custom_call.1} parent=5 // pred_region
        %s134 = ssub.s32 %s17, 1
      $region12: #{tpu_custom_call.1} parent=5 // pred_fallthru
        _
      %p135 = scmp.lt.s32.totalorder %s17, 4
      // Predicated region
      $region13: #{tpu_custom_call.1} parent=5 // pred_check
        %p136 = pneg %p135
      $region14: #{tpu_custom_call.1} parent=5 // pred_check_branch
        %138 = sbr.rel (%p136) target = $region16
      $region15: #{tpu_custom_call.1} parent=5 // pred_region
        // Predicated region
        $region17: #{tpu_custom_call.1} parent=15 // pred_check
          %p139 = pneg %p56
        $region18: #{tpu_custom_call.1} parent=15 // pred_check_branch
          %141 = sbr.rel (%p139) target = $region20
        $region19: #{tpu_custom_call.1} parent=15 // pred_region
          %s142 = sand.u32 %s46, 1
          %s143 = scalar_lea.sflag [#allocation3], %s142
          %s144 = sand.u32 %s46, 1
          %s145 = smul.addr %s144, 136
          %s146 = scalar_lea.vmem [#allocation2], %s145
          %s147 = smul.u32 17, %s24
          %s149 = ssub.s32 2176, 2176
          %150 = vsyncadd %s143, %s149
          %s151 = smul.addr %s147, 2
          %s152 = smul.addr %s151, 64
          %s153 = scalar_lea.hbm %s0, %s152
          %s154 = sshll.u32 %s146, 4
          %s155 = int_to_ptr.vmem [resolvable:$true] %s154
          %160 = dma.hbm_to_vmem [thread:$0]  %s153, 2176, %s155, %s143, 128, 128, 8
        $region20: #{tpu_custom_call.1} parent=15 // pred_fallthru
          _
        // Predicated region
        $region21: #{tpu_custom_call.1} parent=15 // pred_check
          %p161 = pneg %p84
        $region22: #{tpu_custom_call.1} parent=15 // pred_check_branch
          %163 = sbr.rel (%p161) target = $region24
        $region23: #{tpu_custom_call.1} parent=15 // pred_region
          %s164 = sand.u32 %s74, 1
          %s165 = scalar_lea.sflag [#allocation6], %s164
          %s166 = sand.u32 %s74, 1
          %s167 = smul.addr %s166, 128
          %s168 = scalar_lea.vmem [#allocation5], %s167
          %s170 = ssub.s32 2048, 2048
          %171 = vsyncadd %s165, %s170
          %s172 = smul.addr %s25, 32
          %s173 = sadd.s32 %s26, %s172
          %s174 = smul.addr %s173, 64
          %s175 = scalar_lea.hbm %s1, %s174
          %s176 = sshll.u32 %s168, 4
          %s177 = int_to_ptr.vmem [resolvable:$true] %s176
          %182 = dma.hbm_to_vmem [thread:$0]  %s175, 2048, %s177, %s165, 64, 64, 4
        $region24: #{tpu_custom_call.1} parent=15 // pred_fallthru
          _
      $region16: #{tpu_custom_call.1} parent=5 // pred_fallthru
        _
      %p183 = scmp.le.s32.totalorder 1, %s17
      %p184 = scmp.lt.s32.totalorder %s17, 5
      %p185 = pnand %p183, %p184
      %p186 = pneg %p185
      // Predicated region
      $region25: #{tpu_custom_call.1} parent=5 // pred_check
        _
      $region26: #{tpu_custom_call.1} parent=5 // pred_check_branch
        %188 = sbr.rel (%p185) target = $region28
      $region27: #{tpu_custom_call.1} parent=5 // pred_region
        %s189 = ssub.s32 %s17, 1
        %s190 = sand.u32 %s49, 1
        %s191 = scalar_lea.sflag [#allocation3], %s190
        %s192 = sand.u32 %s49, 1
        %s193 = smul.addr %s192, 136
        %s194 = scalar_lea.vmem [#allocation2], %s193
        // Predicated region
        $region29: #{tpu_custom_call.1} parent=27 // pred_check
          %p195 = pneg %p62
        $region30: #{tpu_custom_call.1} parent=27 // pred_check_branch
          %197 = sbr.rel (%p195) target = $region32
        $region31: #{tpu_custom_call.1} parent=27 // pred_region
          %198 = dma.done %s191, 2176
        $region32: #{tpu_custom_call.1} parent=27 // pred_fallthru
          _
        %s199 = sand.u32 %s77, 1
        %s200 = scalar_lea.sflag [#allocation6], %s199
        %s201 = sand.u32 %s77, 1
        %s202 = smul.addr %s201, 128
        %s203 = scalar_lea.vmem [#allocation5], %s202
        // Predicated region
        $region33: #{tpu_custom_call.1} parent=27 // pred_check
          %p204 = pneg %p90
        $region34: #{tpu_custom_call.1} parent=27 // pred_check_branch
          %206 = sbr.rel (%p204) target = $region36
        $region35: #{tpu_custom_call.1} parent=27 // pred_region
          %207 = dma.done %s200, 2048
        $region36: #{tpu_custom_call.1} parent=27 // pred_fallthru
          _
        %s208 = sand.u32 %s49, 1
        %s209 = scalar_lea.sflag [#allocation3], %s208
        %s210 = sand.u32 %s49, 1
        %s211 = smul.addr %s210, 136
        %s212 = scalar_lea.vmem [#allocation2], %s211
        %p213 = pneg %p62
        %p214 = pneg %p59
        %s215 = sand.u32 %s77, 1
        %s216 = scalar_lea.sflag [#allocation6], %s215
        %s217 = sand.u32 %s77, 1
        %s218 = smul.addr %s217, 128
        %s219 = scalar_lea.vmem [#allocation5], %s218
        %p220 = pneg %p90
        %p221 = pneg %p87
        %p222 = pneg %p120
        %p223 = pneg %p117
        %s224 = sand.u32 %s107, 1
        %s225 = scalar_lea.sflag [#allocation4], %s224
        %s226 = sand.u32 %s107, 1
        %s227 = smul.addr %s226, 136
        %s228 = scalar_lea.vmem [#allocation7], %s227
        %s229 = smul.u32 17, %s27
        %s230 = smul.u32 17, %s27
        %v232 = vld [vmem:[%s194] sm:$0xff]
        %v233 = vld [vmem:[%s194 + $0x8] sm:$0xff]
        %v234 = vld [vmem:[%s194 + $0x10] sm:$0xff]
        %v235 = vld [vmem:[%s194 + $0x18] sm:$0xff]
        %v236 = vld [vmem:[%s194 + $0x20] sm:$0xff]
        %v237 = vld [vmem:[%s194 + $0x28] sm:$0xff]
        %v238 = vld [vmem:[%s194 + $0x30] sm:$0xff]
        %v239 = vld [vmem:[%s194 + $0x38] sm:$0xff]
        %v240 = vld [vmem:[%s194 + $0x40] sm:$0xff]
        %v241 = vld [vmem:[%s194 + $0x48] sm:$0xff]
        %v242 = vld [vmem:[%s194 + $0x50] sm:$0xff]
        %v243 = vld [vmem:[%s194 + $0x58] sm:$0xff]
        %v244 = vld [vmem:[%s194 + $0x60] sm:$0xff]
        %v245 = vld [vmem:[%s194 + $0x68] sm:$0xff]
        %v246 = vld [vmem:[%s194 + $0x70] sm:$0xff]
        %v247 = vld [vmem:[%s194 + $0x78] sm:$0xff]
        %v248 = vld [vmem:[%s194 + $0x80] sm:$0xff]
        %v249 = vld [vmem:[%s203] sm:$0xf]
        %v250 = vld [vmem:[%s203 + $0x4] sm:$0xf]
        %v251 = vld [vmem:[%s203 + $0x8] sm:$0xf]
        %v252 = vld [vmem:[%s203 + $0xc] sm:$0xf]
        %v253 = vld [vmem:[%s203 + $0x10] sm:$0xf]
        %v254 = vld [vmem:[%s203 + $0x14] sm:$0xf]
        %v255 = vld [vmem:[%s203 + $0x18] sm:$0xf]
        %v256 = vld [vmem:[%s203 + $0x1c] sm:$0xf]
        %v257 = vld [vmem:[%s203 + $0x20] sm:$0xf]
        %v258 = vld [vmem:[%s203 + $0x24] sm:$0xf]
        %v259 = vld [vmem:[%s203 + $0x28] sm:$0xf]
        %v260 = vld [vmem:[%s203 + $0x2c] sm:$0xf]
        %v261 = vld [vmem:[%s203 + $0x30] sm:$0xf]
        %v262 = vld [vmem:[%s203 + $0x34] sm:$0xf]
        %v263 = vld [vmem:[%s203 + $0x38] sm:$0xf]
        %v264 = vld [vmem:[%s203 + $0x3c] sm:$0xf]
        %v265 = vld [vmem:[%s203 + $0x40] sm:$0xf]
        %v266 = vld [vmem:[%s203 + $0x44] sm:$0xf]
        %v267 = vld [vmem:[%s203 + $0x48] sm:$0xf]
        %v268 = vld [vmem:[%s203 + $0x4c] sm:$0xf]
        %v269 = vld [vmem:[%s203 + $0x50] sm:$0xf]
        %v270 = vld [vmem:[%s203 + $0x54] sm:$0xf]
        %v271 = vld [vmem:[%s203 + $0x58] sm:$0xf]
        %v272 = vld [vmem:[%s203 + $0x5c] sm:$0xf]
        %v273 = vld [vmem:[%s203 + $0x60] sm:$0xf]
        %v274 = vld [vmem:[%s203 + $0x64] sm:$0xf]
        %v275 = vld [vmem:[%s203 + $0x68] sm:$0xf]
        %v276 = vld [vmem:[%s203 + $0x6c] sm:$0xf]
        %v277 = vld [vmem:[%s203 + $0x70] sm:$0xf]
        %v278 = vld [vmem:[%s203 + $0x74] sm:$0xf]
        %v279 = vld [vmem:[%s203 + $0x78] sm:$0xf]
        %v280 = vld [vmem:[%s203 + $0x7c] sm:$0xf]
        %v298 = vunpack.c.l.b16 %v232
        %v299 = vunpack.c.h.b16 %v232
        %v300 = vunpack.c.l.b16 %v233
        %v301 = vunpack.c.h.b16 %v233
        %v302 = vunpack.c.l.b16 %v234
        %v303 = vunpack.c.h.b16 %v234
        %v304 = vunpack.c.l.b16 %v235
        %v305 = vunpack.c.h.b16 %v235
        %v306 = vunpack.c.l.b16 %v236
        %v307 = vunpack.c.h.b16 %v236
        %v308 = vunpack.c.l.b16 %v237
        %v309 = vunpack.c.h.b16 %v237
        %v310 = vunpack.c.l.b16 %v238
        %v311 = vunpack.c.h.b16 %v238
        %v312 = vunpack.c.l.b16 %v239
        %v313 = vunpack.c.h.b16 %v239
        %v314 = vunpack.c.l.b16 %v240
        %v315 = vunpack.c.h.b16 %v240
        %v316 = vunpack.c.l.b16 %v241
        %v317 = vunpack.c.h.b16 %v241
        %v318 = vunpack.c.l.b16 %v242
        %v319 = vunpack.c.h.b16 %v242
        %v320 = vunpack.c.l.b16 %v243
        %v321 = vunpack.c.h.b16 %v243
        %v322 = vunpack.c.l.b16 %v244
        %v323 = vunpack.c.h.b16 %v244
        %v324 = vunpack.c.l.b16 %v245
        %v325 = vunpack.c.h.b16 %v245
        %v326 = vunpack.c.l.b16 %v246
        %v327 = vunpack.c.h.b16 %v246
        %v328 = vunpack.c.l.b16 %v247
        %v329 = vunpack.c.h.b16 %v247
        %v330 = vunpack.c.l.b16 %v248
        %v331 = vunpack.c.h.b16 %v248
        %v332 = vpack.c.b16 %v300, %v298
        %v333 = vpack.c.b16 %v301, %v299
        %v334 = vpack.c.b16 %v304, %v302
        %v335 = vpack.c.b16 %v305, %v303
        %v336 = vpack.c.b16 %v308, %v306
        %v337 = vpack.c.b16 %v309, %v307
        %v338 = vpack.c.b16 %v312, %v310
        %v339 = vpack.c.b16 %v313, %v311
        %v340 = vpack.c.b16 %v316, %v314
        %v341 = vpack.c.b16 %v317, %v315
        %v342 = vpack.c.b16 %v320, %v318
        %v343 = vpack.c.b16 %v321, %v319
        %v344 = vpack.c.b16 %v324, %v322
        %v345 = vpack.c.b16 %v325, %v323
        %v346 = vpack.c.b16 %v328, %v326
        %v347 = vpack.c.b16 %v329, %v327
        %v348 = vpack.c.b16 %v330, %v330
        %v349 = vpack.c.b16 %v331, %v331
        %v400 = vunpack.c.l.b16 %v249
        %v401 = vunpack.c.l.b16 %v250
        %v402 = vunpack.c.l.b16 %v251
        %v403 = vunpack.c.l.b16 %v252
        %v404 = vunpack.c.l.b16 %v253
        %v405 = vunpack.c.l.b16 %v254
        %v406 = vunpack.c.l.b16 %v255
        %v407 = vunpack.c.l.b16 %v256
        %v408 = vunpack.c.l.b16 %v257
        %v409 = vunpack.c.l.b16 %v258
        %v410 = vunpack.c.l.b16 %v259
        %v411 = vunpack.c.l.b16 %v260
        %v412 = vunpack.c.l.b16 %v261
        %v413 = vunpack.c.l.b16 %v262
        %v414 = vunpack.c.l.b16 %v263
        %v415 = vunpack.c.l.b16 %v264
        %v416 = vunpack.c.l.b16 %v265
        %v417 = vunpack.c.l.b16 %v266
        %v418 = vunpack.c.l.b16 %v267
        %v419 = vunpack.c.l.b16 %v268
        %v420 = vunpack.c.l.b16 %v269
        %v421 = vunpack.c.l.b16 %v270
        %v422 = vunpack.c.l.b16 %v271
        %v423 = vunpack.c.l.b16 %v272
        %v424 = vunpack.c.l.b16 %v273
        %v425 = vunpack.c.l.b16 %v274
        %v426 = vunpack.c.l.b16 %v275
        %v427 = vunpack.c.l.b16 %v276
        %v428 = vunpack.c.l.b16 %v277
        %v429 = vunpack.c.l.b16 %v278
        %v430 = vunpack.c.l.b16 %v279
        %v431 = vunpack.c.l.b16 %v280
        %v432 = vpack.c.b16 %v401, %v400
        %v433 = vpack.c.b16 %v403, %v402
        %v434 = vpack.c.b16 %v405, %v404
        %v435 = vpack.c.b16 %v407, %v406
        %v436 = vpack.c.b16 %v409, %v408
        %v437 = vpack.c.b16 %v411, %v410
        %v438 = vpack.c.b16 %v413, %v412
        %v439 = vpack.c.b16 %v415, %v414
        %v440 = vpack.c.b16 %v417, %v416
        %v441 = vpack.c.b16 %v419, %v418
        %v442 = vpack.c.b16 %v421, %v420
        %v443 = vpack.c.b16 %v423, %v422
        %v444 = vpack.c.b16 %v425, %v424
        %v445 = vpack.c.b16 %v427, %v426
        %v446 = vpack.c.b16 %v429, %v428
        %v447 = vpack.c.b16 %v431, %v430
        %464 = vmatprep.subr.bf16.mxu0 0
        %465 = vmatpush1.bf16.msra.mxu0 %v432
        %466 = vmatprep.subr.bf16.mxu0 0
        %467 = vmatpush1.bf16.msra.mxu0 %v433
        %468 = vmatprep.subr.bf16.mxu0 0
        %469 = vmatpush1.bf16.msra.mxu0 %v434
        %470 = vmatprep.subr.bf16.mxu0 0
        %471 = vmatpush1.bf16.msra.mxu0 %v435
        %472 = vmatprep.subr.bf16.mxu0 0
        %473 = vmatpush1.bf16.msra.mxu0 %v436
        %474 = vmatprep.subr.bf16.mxu0 0
        %475 = vmatpush1.bf16.msra.mxu0 %v437
        %476 = vmatprep.subr.bf16.mxu0 0
        %477 = vmatpush1.bf16.msra.mxu0 %v438
        %478 = vmatprep.subr.bf16.mxu0 0
        %479 = vmatpush1.bf16.msra.mxu0 %v439
        %480 = vmatprep.subr.bf16.mxu0 0
        %481 = vmatpush1.bf16.msra.mxu0 %v440
        %482 = vmatprep.subr.bf16.mxu0 0
        %483 = vmatpush1.bf16.msra.mxu0 %v441
        %484 = vmatprep.subr.bf16.mxu0 0
        %485 = vmatpush1.bf16.msra.mxu0 %v442
        %486 = vmatprep.subr.bf16.mxu0 0
        %487 = vmatpush1.bf16.msra.mxu0 %v443
        %488 = vmatprep.subr.bf16.mxu0 0
        %489 = vmatpush1.bf16.msra.mxu0 %v444
        %490 = vmatprep.subr.bf16.mxu0 0
        %491 = vmatpush1.bf16.msra.mxu0 %v445
        %492 = vmatprep.subr.bf16.mxu0 0
        %493 = vmatpush1.bf16.msra.mxu0 %v446
        %494 = vmatprep.subr.bf16.mxu0 0
        %495 = vmatpush1.bf16.msra.mxu0 %v447
        %496 = vmatprep.mubr.bf16.mxu0 %v333
        %497 = vmatmul.mubr.bf16.gmra.mrb[0].mxu0 %v332
        %v498 = vpop.f32.mrb[0].mxu0
        %v499 = vadd.f32 0.0, %v498
        %v500 = vpop.f32.mrb[0].mxu0
        %v501 = vpop.f32.mrb[0].mxu0
        %v502 = vadd.f32 0.0, %v501
        %v503 = vpop.f32.mrb[0].mxu0
        %504 = vmatprep.mubr.bf16.mxu0 %v335
        %505 = vmatmul.mubr.bf16.gmra.mrb[0].mxu0 %v334
        %v506 = vpop.f32.mrb[0].mxu0
        %v507 = vadd.f32 0.0, %v506
        %v508 = vpop.f32.mrb[0].mxu0
        %v509 = vpop.f32.mrb[0].mxu0
        %v510 = vadd.f32 0.0, %v509
        %v511 = vpop.f32.mrb[0].mxu0
        %512 = vmatprep.mubr.bf16.mxu0 %v337
        %513 = vmatmul.mubr.bf16.gmra.mrb[0].mxu0 %v336
        %v514 = vpop.f32.mrb[0].mxu0
        %v515 = vadd.f32 0.0, %v514
        %v516 = vpop.f32.mrb[0].mxu0
        %v517 = vpop.f32.mrb[0].mxu0
        %v518 = vadd.f32 0.0, %v517
        %v519 = vpop.f32.mrb[0].mxu0
        %520 = vmatprep.mubr.bf16.mxu0 %v339
        %521 = vmatmul.mubr.bf16.gmra.mrb[0].mxu0 %v338
        %v522 = vpop.f32.mrb[0].mxu0
        %v523 = vadd.f32 0.0, %v522
        %v524 = vpop.f32.mrb[0].mxu0
        %v525 = vpop.f32.mrb[0].mxu0
        %v526 = vadd.f32 0.0, %v525
        %v527 = vpop.f32.mrb[0].mxu0
        %528 = vmatprep.mubr.bf16.mxu0 %v341
        %529 = vmatmul.mubr.bf16.gmra.mrb[0].mxu0 %v340
        %v530 = vpop.f32.mrb[0].mxu0
        %v531 = vadd.f32 0.0, %v530
        %v532 = vpop.f32.mrb[0].mxu0
        %v533 = vpop.f32.mrb[0].mxu0
        %v534 = vadd.f32 0.0, %v533
        %v535 = vpop.f32.mrb[0].mxu0
        %536 = vmatprep.mubr.bf16.mxu0 %v343
        %537 = vmatmul.mubr.bf16.gmra.mrb[0].mxu0 %v342
        %v538 = vpop.f32.mrb[0].mxu0
        %v539 = vadd.f32 0.0, %v538
        %v540 = vpop.f32.mrb[0].mxu0
        %v541 = vpop.f32.mrb[0].mxu0
        %v542 = vadd.f32 0.0, %v541
        %v543 = vpop.f32.mrb[0].mxu0
        %544 = vmatprep.mubr.bf16.mxu0 %v345
        %545 = vmatmul.mubr.bf16.gmra.mrb[0].mxu0 %v344
        %v546 = vpop.f32.mrb[0].mxu0
        %v547 = vadd.f32 0.0, %v546
        %v548 = vpop.f32.mrb[0].mxu0
        %v549 = vpop.f32.mrb[0].mxu0
        %v550 = vadd.f32 0.0, %v549
        %v551 = vpop.f32.mrb[0].mxu0
        %552 = vmatprep.mubr.bf16.mxu0 %v347
        %553 = vmatmul.mubr.bf16.gmra.mrb[0].mxu0 %v346
        %v554 = vpop.f32.mrb[0].mxu0
        %v555 = vadd.f32 0.0, %v554
        %v556 = vpop.f32.mrb[0].mxu0
        %v557 = vpop.f32.mrb[0].mxu0
        %v558 = vadd.f32 0.0, %v557
        %v559 = vpop.f32.mrb[0].mxu0
        %560 = vmatprep.mubr.bf16.mxu0 %v349
        %561 = vmatmul.mubr.bf16.gmra.mrb[0].mxu0 %v348
        %v562 = vpop.f32.mrb[0].mxu0
        %v563 = vadd.f32 0.0, %v562
        %v564 = vpop.f32.mrb[0].mxu0
        %v565 = vpop.f32.mrb[0].mxu0
        %v566 = vpop.f32.mrb[0].mxu0
        %567 = vdwg.mxu0
        %568 = vst [vmem:[%s228] sm:$0xff] %v499
        %569 = vst [vmem:[%s228 + $0x8] sm:$0xff] %v502
        %570 = vst [vmem:[%s228 + $0x10] sm:$0xff] %v507
        %571 = vst [vmem:[%s228 + $0x18] sm:$0xff] %v510
        %572 = vst [vmem:[%s228 + $0x20] sm:$0xff] %v515
        %573 = vst [vmem:[%s228 + $0x28] sm:$0xff] %v518
        %574 = vst [vmem:[%s228 + $0x30] sm:$0xff] %v523
        %575 = vst [vmem:[%s228 + $0x38] sm:$0xff] %v526
        %576 = vst [vmem:[%s228 + $0x40] sm:$0xff] %v531
        %577 = vst [vmem:[%s228 + $0x48] sm:$0xff] %v534
        %578 = vst [vmem:[%s228 + $0x50] sm:$0xff] %v539
        %579 = vst [vmem:[%s228 + $0x58] sm:$0xff] %v542
        %580 = vst [vmem:[%s228 + $0x60] sm:$0xff] %v547
        %581 = vst [vmem:[%s228 + $0x68] sm:$0xff] %v550
        %582 = vst [vmem:[%s228 + $0x70] sm:$0xff] %v555
        %583 = vst [vmem:[%s228 + $0x78] sm:$0xff] %v558
        %584 = vst [vmem:[%s228 + $0x80] sm:$0xff] %v563
        %s585 = sand.u32 %s107, 1
        %s586 = scalar_lea.sflag [#allocation4], %s585
        %s587 = sand.u32 %s107, 1
        %s588 = smul.addr %s587, 136
        %s589 = scalar_lea.vmem [#allocation7], %s588
        // Predicated region
        $region37: #{tpu_custom_call.1} parent=27 // pred_check
          %p590 = pneg %p117
        $region38: #{tpu_custom_call.1} parent=27 // pred_check_branch
          %592 = sbr.rel (%p590) target = $region40
        $region39: #{tpu_custom_call.1} parent=27 // pred_region
          %s593 = smul.u32 17, %s27
          %s595 = ssub.s32 2176, 2176
          %596 = vsyncadd %s586, %s595
          %s597 = sadd.s32 %s29, %s593
          %s598 = smul.addr %s28, 34
          %s599 = sadd.s32 %s597, %s598
          %s600 = smul.addr %s599, 128
          %s601 = scalar_lea.hbm %s2, %s600
          %s602 = sshll.u32 %s589, 4
          %s603 = int_to_ptr.vmem [resolvable:$true] %s602
          %608 = dma.vmem_to_hbm [thread:$0]  %s603, 2176, %s601, %s586, 128, 128, 8
        $region40: #{tpu_custom_call.1} parent=27 // pred_fallthru
          _
      $region28: #{tpu_custom_call.1} parent=5 // pred_fallthru
        _
      %p609 = scmp.le.s32.totalorder 2, %s17
      // Predicated region
      $region41: #{tpu_custom_call.1} parent=5 // pred_check
        %p610 = pneg %p609
      $region42: #{tpu_custom_call.1} parent=5 // pred_check_branch
        %612 = sbr.rel (%p610) target = $region44
      $region43: #{tpu_custom_call.1} parent=5 // pred_region
        %s613 = ssub.s32 %s17, 2
        // Predicated region
        $region45: #{tpu_custom_call.1} parent=43 // pred_check
          %p614 = pneg %p123
        $region46: #{tpu_custom_call.1} parent=43 // pred_check_branch
          %616 = sbr.rel (%p614) target = $region48
        $region47: #{tpu_custom_call.1} parent=43 // pred_region
          %s617 = sand.u32 %s108, 1
          %s618 = scalar_lea.sflag [#allocation4], %s617
          %s619 = sand.u32 %s108, 1
          %s620 = smul.addr %s619, 136
          %s621 = scalar_lea.vmem [#allocation7], %s620
          %622 = dma.done %s618, 2176
        $region48: #{tpu_custom_call.1} parent=43 // pred_fallthru
          _
      $region44: #{tpu_custom_call.1} parent=5 // pred_fallthru
        _
    $region6: #{tpu_custom_call.1} parent=1 // loop_footer
      %s21 = sadd.s32 1, %s17
    $region7: #{tpu_custom_call.1} parent=1 // loop_footer_branch
      %16 = sbr.rel target = $region3
    $region8: #{tpu_custom_call.1} parent=1 // loop_exit
      _
    %623 = vsyncpa [#allocation3], 1
    %s624 = scalar_lea.sflag [#allocation3], 1
    %625 = vsyncpa %s624, 1
    %626 = vsyncpa [#allocation6], 1
    %s627 = scalar_lea.sflag [#allocation6], 1
    %628 = vsyncpa %s627, 1
    %629 = vsyncpa [#allocation4], 1
    %s630 = scalar_lea.sflag [#allocation4], 1
    %631 = vsyncpa %s630, 1

</llo_original>
